<compile_context>
chip_gen: v7x
topology: tpu7x:2x2x1
jax: 0.10.0
libtpu: 0.0.40
codegen_flags: <defaults>
</compile_context>

<pallas_src>
import functools
import math

import jax
import jax.numpy as jnp
from jax.experimental import pallas as pl
from jax.experimental.pallas import tpu as pltpu


def _rmsnorm_kernel(x_ref, w_ref, o_ref, *, eps: float, inv_d: float):
    # Compute in float32, exactly like the PyTorch reference (x.to(float32)).
    xf = x_ref[...].astype(jnp.float32)                        # (tile_rows, d)
    ms = jnp.sum(xf * xf, axis=-1, keepdims=True) * inv_d      # (tile_rows, 1)
    inv_rms = jax.lax.rsqrt(ms + eps)                          # EUP rsqrt
    # Re-read x_ref so the f32 upcast need not stay live across the reduction.
    o_ref[...] = (x_ref[...].astype(jnp.float32) * inv_rms * w_ref[...]
                  ).astype(o_ref.dtype)


def _round_up(x: int, m: int) -> int:
    return ((x + m - 1) // m) * m


def _round_down_min(x: int, m: int) -> int:
    return max(m, (x // m) * m)


def _pick_row_tile(rows: int, d_model: int, itemsize: int,
                   *, target_block_bytes: int = 2 << 20,
                   min_block_bytes: int = 1 << 20,
                   min_grid_steps: int = 8) -> int:
    """Row tile sized by block bytes (~1-4 MiB roofline plateau), aligned to
    the dtype's sublane packing, keeping >= min_grid_steps grid steps while
    blocks stay >= min_block_bytes (>= 4 pipelined steps per v7x TC)."""
    sub = max(8, 32 // max(itemsize, 1))          # 8 f32 / 16 bf16 / 32 int8
    row_bytes = max(d_model * itemsize, 1)
    tile = _round_down_min(target_block_bytes // row_bytes, sub)
    if rows >= min_grid_steps * sub:
        steps_cap = _round_up(pl.cdiv(rows, min_grid_steps), sub)
        min_tile = _round_down_min(min_block_bytes // row_bytes, sub)
        tile = min(tile, max(steps_cap, min_tile))
    # No point in a tile bigger than the (sublane-rounded) row count.
    tile = min(tile, _round_up(max(rows, 1), sub))
    return tile


def rmsnorm(x: jax.Array, weight: jax.Array, eps: float = 1e-5) -> jax.Array:
    """RMSNorm over the last axis of x, matching the PyTorch module's forward."""
    orig_shape = x.shape
    d_model = orig_shape[-1]
    assert weight.shape == (d_model,)

    # Narrow-lane guard: d_model < 128 would force masked partial stores and
    # waste 3/4+ of every vreg -- plain XLA is faster there.
    if d_model < 128:
        return rmsnorm_ref(x, weight, eps=eps)

    rows = math.prod(orig_shape[:-1]) if len(orig_shape) > 1 else 1
    rows = max(rows, 1)
    x2d = x.reshape(rows, d_model)
    # Pre-cast weight to f32 once: DMA'd once (constant index_map), removes the
    # per-grid-step upcast inside the kernel.
    w2d = weight.astype(jnp.float32).reshape(1, d_model)

    itemsize = jnp.dtype(x.dtype).itemsize
    tile = _pick_row_tile(rows, d_model, itemsize)
    grid_rows = pl.cdiv(rows, tile)

    # Generation-aware VMEM limit: actual footprint (double-buffered in+out
    # blocks, resident weight, transient f32 temporaries) + 25% headroom +
    # compiler scratch, clamped to [16 MiB, 32 MiB] (safe on v7x's 64 MiB).
    block_bytes = tile * d_model * itemsize
    f32_tmp_bytes = 2 * tile * d_model * 4
    footprint = 4 * block_bytes + 2 * d_model * 4 + f32_tmp_bytes
    vmem_limit = int(footprint * 1.25) + (4 << 20)
    vmem_limit = min(max(vmem_limit, 16 << 20), 32 << 20)

    kernel = functools.partial(_rmsnorm_kernel, eps=float(eps),
                               inv_d=1.0 / float(d_model))

    out2d = pl.pallas_call(
        kernel,
        out_shape=jax.ShapeDtypeStruct((rows, d_model), x.dtype),
        grid_spec=pltpu.PrefetchScalarGridSpec(
            num_scalar_prefetch=0,
            grid=(grid_rows,),
            in_specs=[
                pl.BlockSpec((tile, d_model), lambda i: (i, 0)),  # x row tile
                pl.BlockSpec((1, d_model), lambda i: (0, 0)),     # weight (resident)
            ],
            out_specs=pl.BlockSpec((tile, d_model), lambda i: (i, 0)),
        ),
        compiler_params=pltpu.CompilerParams(
            dimension_semantics=("parallel",),
            vmem_limit_bytes=vmem_limit,
        ),
    )(x2d, w2d)

    return out2d.reshape(orig_shape)


def rmsnorm_ref(x, weight, eps=1e-5):
    """Pure-JAX reference mirroring the PyTorch forward exactly."""
    in_dtype = x.dtype
    xf = x.astype(jnp.float32)
    rms = jnp.sqrt(jnp.sum(xf * xf, axis=-1, keepdims=True) / x.shape[-1] + eps)
    return (xf / rms * weight.astype(jnp.float32)).astype(in_dtype)


if __name__ == "__main__":
    key = jax.random.PRNGKey(0)
    k1, k2, k3, k4, k5 = jax.random.split(key, 5)
    eps = 1e-5

    # Case 1: f32, small shape consistent with the module (batch=2, seq=8,
    # d_model=128 so the Pallas path is exercised with full 128-lane stores).
    batch, seq, d_model = 2, 8, 128
    x = jax.random.normal(k1, (batch, seq, d_model), dtype=jnp.float32)
    weight = 1.0 + 0.1 * jax.random.normal(k2, (d_model,), dtype=jnp.float32)
    out = rmsnorm(x, weight, eps=eps)
    jax.block_until_ready(out)
    ref = rmsnorm_ref(x, weight, eps=eps)
    assert out.shape == x.shape and out.dtype == x.dtype
    assert jnp.allclose(out, ref, atol=1e-5, rtol=1e-5)

    # Case 2: bf16 with a row count that does NOT fill the tile (ragged last
    # block, no wrapper-side padding; exercises bf16 sublane packing).
    x_b = jax.random.normal(k3, (3, 5, 256), dtype=jnp.bfloat16)
    w_b = (1.0 + 0.1 * jax.random.normal(k4, (256,), dtype=jnp.float32)
           ).astype(jnp.bfloat16)
    out_b = rmsnorm(x_b, w_b, eps=eps)
    jax.block_until_ready(out_b)
    ref_b = rmsnorm_ref(x_b, w_b, eps=eps)
    assert out_b.shape == x_b.shape and out_b.dtype == x_b.dtype
    assert jnp.allclose(out_b.astype(jnp.float32), ref_b.astype(jnp.float32),
                        atol=1e-2, rtol=1e-2)

    # Case 3: multiple grid steps with a ragged final block (rows=1040,
    # tile picked at 1024 -> grid of 2, last block 16 valid rows).
    x_m = jax.random.normal(k5, (4, 260, 256), dtype=jnp.float32)
    w_m = jnp.ones((256,), dtype=jnp.float32)
    out_m = rmsnorm(x_m, w_m, eps=eps)
    jax.block_until_ready(out_m)
    ref_m = rmsnorm_ref(x_m, w_m, eps=eps)
    assert jnp.allclose(out_m, ref_m, atol=1e-5, rtol=1e-5)

    # Case 4: tiny d_model (32) -> narrow-lane XLA fallback path.
    x_s = jax.random.normal(k1, (2, 8, 32), dtype=jnp.float32)
    w_s = jnp.ones((32,), dtype=jnp.float32)
    out_s = rmsnorm(x_s, w_s, eps=eps)
    jax.block_until_ready(out_s)
    ref_s = rmsnorm_ref(x_s, w_s, eps=eps)
    assert jnp.allclose(out_s, ref_s, atol=1e-5, rtol=1e-5)

    print("KERNEL_OK")
</pallas_src>

<mosaic_0001>
module attributes {stable_mosaic.version = 11 : i64} {
  func.func @_rmsnorm_kernel(%arg0: i32, %arg1: memref<16x128xf32, #tpu.memory_space<vmem>>, %arg2: memref<1x128xf32, #tpu.memory_space<vmem>>, %arg3: memref<16x128xf32, #tpu.memory_space<vmem>>) attributes {dimension_semantics = [#tpu.dimension_semantics<parallel>], iteration_bounds = array<i64: 1>, scalar_prefetch = 0 : i64, scratch_operands = 0 : i64, tpu.core_type = #tpu.core_type<tc>, window_params = [{transform_indices = @transform_0, window_bounds = array<i64: 16, 128>}, {pipeline_mode = #tpu.pipeline_mode<synchronous>, transform_indices = @transform_1, window_bounds = array<i64: 1, 128>}, {transform_indices = @transform_2, window_bounds = array<i64: 16, 128>}]} {
    %c0 = arith.constant 0 : index
    %c0_0 = arith.constant 0 : index
    %0 = vector.load %arg1[%c0, %c0_0] : memref<16x128xf32, #tpu.memory_space<vmem>>, vector<16x128xf32>
    %1 = arith.mulf %0, %0 : vector<16x128xf32>
    %cst = arith.constant dense<0.000000e+00> : vector<16xf32>
    %2 = vector.multi_reduction <add>, %1, %cst [1] : vector<16x128xf32> to vector<16xf32>
    %3 = vector.shape_cast %2 : vector<16xf32> to vector<16x1xf32>
    %cst_1 = arith.constant 7.812500e-03 : f32
    %4 = vector.broadcast %cst_1 : f32 to vector<16x1xf32>
    %5 = arith.mulf %3, %4 : vector<16x1xf32>
    %cst_2 = arith.constant 9.99999974E-6 : f32
    %6 = vector.broadcast %cst_2 : f32 to vector<16x1xf32>
    %7 = arith.addf %5, %6 : vector<16x1xf32>
    %8 = math.rsqrt %7 : vector<16x1xf32>
    %c0_3 = arith.constant 0 : index
    %c0_4 = arith.constant 0 : index
    %9 = vector.load %arg1[%c0_3, %c0_4] : memref<16x128xf32, #tpu.memory_space<vmem>>, vector<16x128xf32>
    %10 = vector.broadcast %8 : vector<16x1xf32> to vector<16x128xf32>
    %11 = arith.mulf %9, %10 : vector<16x128xf32>
    %c0_5 = arith.constant 0 : index
    %c0_6 = arith.constant 0 : index
    %12 = vector.load %arg2[%c0_5, %c0_6] : memref<1x128xf32, #tpu.memory_space<vmem>>, vector<1x128xf32>
    %13 = vector.broadcast %12 : vector<1x128xf32> to vector<16x128xf32>
    %14 = arith.mulf %11, %13 : vector<16x128xf32>
    %c0_7 = arith.constant 0 : index
    %c0_8 = arith.constant 0 : index
    %15 = vector.load %arg3[%c0_7, %c0_8] : memref<16x128xf32, #tpu.memory_space<vmem>>, vector<16x128xf32>
    tpu.vector_store %arg3[%c0_7, %c0_8], %14 {strides = array<i32>} : memref<16x128xf32, #tpu.memory_space<vmem>>, vector<16x128xf32>,
    return
  }
  func.func @transform_0(%arg0: i32) -> (i32, i32) {
    %c0_i32 = arith.constant 0 : i32
    %c0_i32_0 = arith.constant 0 : i32
    return %arg0, %c0_i32 : i32, i32
  }
  func.func @transform_1(%arg0: i32) -> (i32, i32) {
    %c0_i32 = arith.constant 0 : i32
    %c0_i32_0 = arith.constant 0 : i32
    %c0_i32_1 = arith.constant 0 : i32
    return %c0_i32, %c0_i32_0 : i32, i32
  }
  func.func @transform_2(%arg0: i32) -> (i32, i32) {
    %c0_i32 = arith.constant 0 : i32
    %c0_i32_0 = arith.constant 0 : i32
    return %arg0, %c0_i32 : i32, i32
  }
}

</mosaic_0001>

<llo_original>
// kernel: tpu_custom_call.1
$region0: #{tpu_custom_call.1}
  #allocation0 [shape = 'u32[]', space=smem, size = 0x4, offset = 0x4, fixed_abs, tag = 'smem constant byte address 0x4 - core index']
  #allocation1 [shape = 'u32[144,128]{1,0:T(1,128)}', space=vmem, size = 0x12000, scoped, tag = 'internal scratch']
  %s0 = inlined_call_operand.hbm [shape: f32[16,128], index: 0, kind: input, shape index: {}]
  %s1 = inlined_call_operand.vmem [shape: f32[1,128], index: 1, kind: input, shape index: {}]
  %s2 = inlined_call_operand.hbm [shape: f32[16,128], index: 2, kind: output, shape index: {}]
  %s3 = sld [smem:[#allocation0]]
  $region22: #{tpu_custom_call.1} parent=0
    _
  %s5 = ssub.s32 1, %s3
  %s6 = scalar_select 0, %s5, %s3
  $region1: #{tpu_custom_call.1} parent=0
    #allocation2 [shape = 'u8[8192]{0}', space=vmem, size = 0x2000, scoped, tag = 'input window, operand 0, single buffered']
    #allocation3 [shape = 's32[1]{0}', space=sflag, size = 0x4, scoped, tag = 'scoped memory for tpu_custom_call.1']
    #allocation4 [shape = 's32[1]{0}', space=sflag, size = 0x4, scoped, tag = 'scoped memory for tpu_custom_call.1']
    #allocation5 [shape = 'u8[8192]{0}', space=vmem, size = 0x2000, scoped, tag = 'output window, operand 0, single buffered']
    %7 = vsyncpa [#allocation3], 0
    %8 = vsyncpa [#allocation4], 0
    // Predicated region
    $region2: #{tpu_custom_call.1} parent=1 // pred_check
      _
    $region3: #{tpu_custom_call.1} parent=1 // pred_check_branch
      %10 = sbr.rel (0) target = $region5
    $region4: #{tpu_custom_call.1} parent=1 // pred_region
      %s12 = ssub.s32 256, 256
      %13 = vsyncadd [#allocation3], %s12
      %s14 = sshll.u32 [#allocation2], 4
      %s15 = int_to_ptr.vmem [resolvable:$true] %s14
      %20 = dma.hbm_to_vmem [thread:$0]  %s0, 256, %s15, [#allocation3], 128, 128, 8
    $region5: #{tpu_custom_call.1} parent=1 // pred_fallthru
      _
    // Predicated region
    $region6: #{tpu_custom_call.1} parent=1 // pred_check
      _
    $region7: #{tpu_custom_call.1} parent=1 // pred_check_branch
      %22 = sbr.rel (0) target = $region9
    $region8: #{tpu_custom_call.1} parent=1 // pred_region
      _
    $region9: #{tpu_custom_call.1} parent=1 // pred_fallthru
      _
    // Predicated region
    $region10: #{tpu_custom_call.1} parent=1 // pred_check
      _
    $region11: #{tpu_custom_call.1} parent=1 // pred_check_branch
      %24 = sbr.rel (0) target = $region13
    $region12: #{tpu_custom_call.1} parent=1 // pred_region
      %25 = dma.done [#allocation3], 256
    $region13: #{tpu_custom_call.1} parent=1 // pred_fallthru
      _
    %v26 = vld [vmem:[#allocation2] sm:$0xff]
    %v27 = vld [vmem:[#allocation2 + $0x8] sm:$0xff]
    %v28 = vmul.f32 %v26, %v26
    %v29 = vmul.f32 %v27, %v27
    %30 = vadd.xlane.f32.xlu0 %v28
    %v31 = vpop.xlane.xlu0 %30
    %32 = vadd.xlane.f32.xlu0 %v29
    %v33 = vpop.xlane.xlu0 %32
    %v34 = vmul.f32 %v31, 0.0078125
    %v35 = vmul.f32 %v33, 0.0078125
    %v36 = vadd.f32 %v34, 1e-05
    %v37 = vadd.f32 %v35, 1e-05
    %v38 = vrsqrt.pop %v36
    %v39 = vrsqrt.pop %v37
    %v40 = vmul.f32 %v26, %v38
    %v41 = vmul.f32 %v27, %v39
    %v42 = vld [vmem:[%s1] sm:$0x1]
    %v44 = vlaneseq
    %v45 = vshrl.u32 %v44, 7
    %v46 = vsub.s32 0, %v45
    %v47 = vrot.slane %v42, %v46
    %v49 = vmul.f32 %v40, %v47
    %v50 = vmul.f32 %v41, %v47
    %51 = vst [vmem:[#allocation5] sm:$0xff] %v49
    %52 = vst [vmem:[#allocation5 + $0x8] sm:$0xff] %v50
    // Predicated region
    $region14: #{tpu_custom_call.1} parent=1 // pred_check
      _
    $region15: #{tpu_custom_call.1} parent=1 // pred_check_branch
      %54 = sbr.rel (0) target = $region17
    $region16: #{tpu_custom_call.1} parent=1 // pred_region
      %s56 = ssub.s32 256, 256
      %57 = vsyncadd [#allocation4], %s56
      %s58 = sshll.u32 [#allocation5], 4
      %s59 = int_to_ptr.vmem [resolvable:$true] %s58
      %64 = dma.vmem_to_hbm [thread:$0]  %s59, 256, %s2, [#allocation4], 128, 128, 8
    $region17: #{tpu_custom_call.1} parent=1 // pred_fallthru
      _
    // Predicated region
    $region18: #{tpu_custom_call.1} parent=1 // pred_check
      _
    $region19: #{tpu_custom_call.1} parent=1 // pred_check_branch
      %66 = sbr.rel (0) target = $region21
    $region20: #{tpu_custom_call.1} parent=1 // pred_region
      %67 = dma.done [#allocation4], 256
    $region21: #{tpu_custom_call.1} parent=1 // pred_fallthru
      _
    %68 = vsyncpa [#allocation3], 1
    %69 = vsyncpa [#allocation4], 1

</llo_original>
